<compile_context>
chip_gen: v5e
topology: v5e:2x2
jax: 0.10.0
libtpu: 0.0.40
codegen_flags: <defaults>
</compile_context>

<pallas_src>
import functools

import jax
import jax.numpy as jnp
from jax.experimental import pallas as pl
from jax.experimental.pallas import tpu as pltpu

# ----------------------------------------------------------------------------
# Layer sizes and packed-parameter layout (all static Python ints).
# ----------------------------------------------------------------------------
D_IN, D_H1, D_H2, D_OUT = 4, 8, 4, 2

W1_OFF = 0                          # w1 (4,8) row-major: w1[k,j] -> W1_OFF + k*8 + j
B1_OFF = W1_OFF + D_IN * D_H1       # 32
W2_OFF = B1_OFF + D_H1              # 40, w2 (8,4): w2[k,j] -> W2_OFF + k*4 + j
B2_OFF = W2_OFF + D_H1 * D_H2       # 72
W3_OFF = B2_OFF + D_H2              # 76, w3 (4,2): w3[k,j] -> W3_OFF + k*2 + j
B3_OFF = W3_OFF + D_H2 * D_OUT      # 84
N_PARAMS = B3_OFF + D_OUT           # 86
PACKED_LEN = 128                    # pad packed params to a tidy power of two

CHUNK_SUB = 8                       # sublanes per chunk: one full f32 vreg per row
LANE_QUANTUM = 128 * CHUNK_SUB      # 1024: so (TB//128, 128) satisfies the (8,128) rule
TB_MAX = 64 * 1024                  # lanes per block: ~48*TB bytes incl. double-buffering


# ----------------------------------------------------------------------------
# Kernel.
# ----------------------------------------------------------------------------
def nnactor_kernel(p_ref, s_ref, out_ref, *, compute_dtype, approx_recip):
    # p_ref  : (128,)       f32 SMEM -- packed parameters.
    # s_ref  : (4, S, 128)      VMEM -- state, batch on (sublane, lane); S = TB//128.
    # out_ref: (2, S, 128)      VMEM -- action probabilities, batch on (sublane, lane).
    n_sub = s_ref.shape[1]
    n_chunks = n_sub // CHUNK_SUB

    # Hoist all 86 SMEM scalar reads (and their dtype casts) above the chunk
    # loop; the scalar->vreg splat at each FMA is left to the compiler so it
    # can trade re-splatting against vreg pressure.
    def read_mat(off, n_in, n_out):
        return [[p_ref[off + k * n_out + j].astype(compute_dtype)
                 for j in range(n_out)] for k in range(n_in)]

    def read_vec(off, n):
        return [p_ref[off + j].astype(compute_dtype) for j in range(n)]

    w1, b1 = read_mat(W1_OFF, D_IN, D_H1), read_vec(B1_OFF, D_H1)
    w2, b2 = read_mat(W2_OFF, D_H1, D_H2), read_vec(B2_OFF, D_H2)
    w3, b3 = read_mat(W3_OFF, D_H2, D_OUT), read_vec(B3_OFF, D_OUT)

    def dense(rows, w, b, relu):
        # y[j] = act(sum_k w[k][j] * rows[k] + b[j]) -- scalar-weight VPU FMAs.
        n_in, n_out = len(w), len(b)
        out = []
        for j in range(n_out):
            acc = rows[0] * w[0][j]
            for k in range(1, n_in):
                acc = acc + rows[k] * w[k][j]
            acc = acc + b[j]
            out.append(jnp.maximum(acc, 0.0) if relu else acc)
        return out

    # Rolled loop over one-vreg (8 sublane x 128 lane) chunks: the ~18 live rows
    # (x:4, h1:8, h2:4, logits:2) per chunk stay inside the 64-entry vreg file,
    # so the VPU (the binding slot) is never dragged down by VMEM spill traffic.
    @pl.loop(0, n_chunks)
    def _(c):
        off = pl.multiple_of(c * CHUNK_SUB, CHUNK_SUB)
        x = [s_ref[k, pl.ds(off, CHUNK_SUB), :].astype(compute_dtype)
             for k in range(D_IN)]
        h1 = dense(x, w1, b1, relu=True)
        h2 = dense(h1, w2, b2, relu=True)
        lg = dense(h2, w3, b3, relu=False)

        # 2-class softmax == sigmoid of the logit difference; sign folded into
        # d = l0 - l1 so p1 = 1/(1 + exp(d)).  exp -> EUP; reciprocal -> EUP
        # (approx) or exact divide.  Tail always runs in f32.
        d = (lg[0] - lg[1]).astype(jnp.float32)
        d = jnp.minimum(d, 80.0)                       # keep exp() finite
        denom = 1.0 + jnp.exp(d)
        if approx_recip:
            p1 = pl.reciprocal(denom, approx=True)
        else:
            p1 = 1.0 / denom
        p1 = jnp.clip(p1, 0.0, 1.0)                    # guard approx/rounding excursions
        out_ref[0, pl.ds(off, CHUNK_SUB), :] = (1.0 - p1).astype(out_ref.dtype)
        out_ref[1, pl.ds(off, CHUNK_SUB), :] = p1.astype(out_ref.dtype)


# ----------------------------------------------------------------------------
# Host-side wrappers.
# ----------------------------------------------------------------------------
def _round_up(x, m):
    return (x + m - 1) // m * m


def _choose_tb(batch, tb):
    if tb is not None:
        return _round_up(int(tb), LANE_QUANTUM)
    bp = _round_up(max(int(batch), 1), LANE_QUANTUM)
    # Aim for >= 2 "parallel" grid blocks so both v7x TensorCores get work,
    # capped so the per-block VMEM footprint stays tiny on every generation.
    half = _round_up((bp + 1) // 2, LANE_QUANTUM)
    return max(LANE_QUANTUM, min(TB_MAX, half))


def nnactor_forward_fm(s_fm, packed_params, *, tb=None,
                       compute_dtype=jnp.float32, approx_recip=True):
    """Feature-major forward: s_fm (4, B) -> probabilities (2, B).

    No host-side transposes: keep the rollout/state buffer feature-major and
    consume the (2, B) probabilities directly to avoid two extra HBM passes.
    """
    d, batch = s_fm.shape
    assert d == D_IN
    tb_lanes = _choose_tb(batch, tb)
    bp = _round_up(batch, tb_lanes)
    if bp != batch:
        # Zero padding columns flow through to harmless finite values and are
        # sliced off below.
        s_fm = jnp.pad(s_fm, ((0, 0), (0, bp - batch)))
    s_blk = s_fm.reshape(D_IN, bp // 128, 128)          # free trailing-dim split
    sub = tb_lanes // 128

    kernel = functools.partial(nnactor_kernel, compute_dtype=compute_dtype,
                               approx_recip=approx_recip)
    out = pl.pallas_call(
        kernel,
        out_shape=jax.ShapeDtypeStruct((D_OUT, bp // 128, 128), jnp.float32),
        grid=(bp // tb_lanes,),
        in_specs=[
            pl.BlockSpec(memory_space=pltpu.MemorySpace.SMEM),      # packed params
            pl.BlockSpec((D_IN, sub, 128), lambda i: (0, i, 0)),    # state block
        ],
        out_specs=pl.BlockSpec((D_OUT, sub, 128), lambda i: (0, i, 0)),
        compiler_params=pltpu.CompilerParams(
            dimension_semantics=("parallel",)),
    )(packed_params, s_blk)

    return out.reshape(D_OUT, bp)[:, :batch]


def nnactor_forward(s, packed_params, *, tb=None,
                    compute_dtype=jnp.float32, approx_recip=True):
    """PyTorch-layout convenience wrapper: s (B, 4) -> (B, 2).

    The two transposes below are pure layout plumbing (extra HBM passes);
    production callers should store states feature-major and call
    nnactor_forward_fm directly.
    """
    out_fm = nnactor_forward_fm(jnp.transpose(s), packed_params, tb=tb,
                                compute_dtype=compute_dtype,
                                approx_recip=approx_recip)
    return jnp.transpose(out_fm)


# ----------------------------------------------------------------------------
# Parameter construction (matches PyTorch init_weights) and packing.
# ----------------------------------------------------------------------------
def xavier_uniform(key, fan_in, fan_out):
    # Same distribution as torch.nn.init.xavier_uniform_ (gain=1); generated
    # directly in (in, out) layout (symmetric distribution => equivalent).
    bound = (6.0 / (fan_in + fan_out)) ** 0.5
    return jax.random.uniform(key, (fan_in, fan_out), jnp.float32,
                              minval=-bound, maxval=bound)


def make_params(key):
    k1, k2, k3 = jax.random.split(key, 3)
    return (xavier_uniform(k1, D_IN, D_H1), jnp.full((D_H1,), 0.01, jnp.float32),
            xavier_uniform(k2, D_H1, D_H2), jnp.full((D_H2,), 0.01, jnp.float32),
            xavier_uniform(k3, D_H2, D_OUT), jnp.full((D_OUT,), 0.01, jnp.float32))


def pack_params(params):
    """Flatten all six parameter arrays into one (128,) f32 SMEM buffer."""
    w1, b1, w2, b2, w3, b3 = params
    flat = jnp.concatenate([w1.reshape(-1), b1, w2.reshape(-1), b2,
                            w3.reshape(-1), b3])
    assert flat.shape[0] == N_PARAMS
    return jnp.pad(flat, (0, PACKED_LEN - N_PARAMS)).astype(jnp.float32)


def nnactor_reference(s, params):
    """Pure-JAX reference for correctness checking."""
    w1, b1, w2, b2, w3, b3 = params
    h1 = jnp.maximum(s @ w1 + b1, 0.0)
    h2 = jnp.maximum(h1 @ w2 + b2, 0.0)
    return jax.nn.softmax(h2 @ w3 + b3, axis=-1)


if __name__ == "__main__":
    key = jax.random.PRNGKey(0)
    k_params, k_in1, k_in2 = jax.random.split(key, 3)

    params = make_params(k_params)
    packed = pack_params(params)

    static = ("tb", "compute_dtype", "approx_recip")
    fwd = jax.jit(nnactor_forward, static_argnames=static)
    fwd_fm = jax.jit(nnactor_forward_fm, static_argnames=static)

    # Case 1: tiny batch, exact reciprocal -> bit-level-tight check against the
    # f32 reference (also exercises the lane-padding / slicing path).
    B1 = 8
    s1 = jax.random.normal(k_in1, (B1, D_IN), jnp.float32)
    out1 = jax.block_until_ready(fwd(s1, packed, approx_recip=False))
    ref1 = nnactor_reference(s1, params)
    assert out1.shape == (B1, D_OUT)
    assert jnp.allclose(jnp.sum(out1, axis=-1), 1.0, atol=1e-5)
    assert jnp.allclose(out1, ref1, atol=1e-5, rtol=1e-5)

    # Case 2: feature-major path (no transposes), 2 parallel blocks (v7x
    # megacore), multi-chunk inner loop, default approximate EUP reciprocal.
    B2 = 4096
    s2 = jax.random.normal(k_in2, (B2, D_IN), jnp.float32)
    s2_fm = jnp.transpose(s2)   # stands in for a feature-major rollout buffer
    out2 = jax.block_until_ready(fwd_fm(s2_fm, packed))          # (2, B2)
    ref2 = nnactor_reference(s2, params)
    assert out2.shape == (D_OUT, B2)
    assert jnp.allclose(jnp.sum(out2, axis=0), 1.0, atol=1e-5)
    assert jnp.allclose(jnp.transpose(out2), ref2, atol=1e-2)    # approx-recip tolerance

    # Case 3: bf16 compute path (v6e/v7x VALU win); weights + softmax tail stay f32.
    out3 = jax.block_until_ready(fwd_fm(s2_fm, packed, compute_dtype=jnp.bfloat16))
    assert out3.shape == (D_OUT, B2)
    assert jnp.allclose(jnp.sum(out3, axis=0), 1.0, atol=1e-5)
    assert jnp.allclose(jnp.transpose(out3), ref2, atol=5e-2)    # bf16 tolerance

    print("KERNEL_OK")
</pallas_src>

<mosaic_0001>
module attributes {stable_mosaic.version = 11 : i64} {
  func.func @nnactor_kernel(%arg0: i32, %arg1: memref<128xf32, #tpu.memory_space<smem>>, %arg2: memref<4x8x128xf32, #tpu.memory_space<vmem>>, %arg3: memref<2x8x128xf32, #tpu.memory_space<vmem>>) attributes {dimension_semantics = [#tpu.dimension_semantics<parallel>], iteration_bounds = array<i64: 1>, scalar_prefetch = 0 : i64, scratch_operands = 0 : i64, tpu.core_type = #tpu.core_type<tc>, window_params = [{transform_indices = @transform_0, window_bounds = array<i64: 128>}, {transform_indices = @transform_1, window_bounds = array<i64: 4, 8, 128>}, {transform_indices = @transform_2, window_bounds = array<i64: 2, 8, 128>}]} {
    %c0 = arith.constant 0 : index
    %0 = memref.load %arg1[%c0] : memref<128xf32, #tpu.memory_space<smem>>
    %c1 = arith.constant 1 : index
    %1 = memref.load %arg1[%c1] : memref<128xf32, #tpu.memory_space<smem>>
    %c2 = arith.constant 2 : index
    %2 = memref.load %arg1[%c2] : memref<128xf32, #tpu.memory_space<smem>>
    %c3 = arith.constant 3 : index
    %3 = memref.load %arg1[%c3] : memref<128xf32, #tpu.memory_space<smem>>
    %c4 = arith.constant 4 : index
    %4 = memref.load %arg1[%c4] : memref<128xf32, #tpu.memory_space<smem>>
    %c5 = arith.constant 5 : index
    %5 = memref.load %arg1[%c5] : memref<128xf32, #tpu.memory_space<smem>>
    %c6 = arith.constant 6 : index
    %6 = memref.load %arg1[%c6] : memref<128xf32, #tpu.memory_space<smem>>
    %c7 = arith.constant 7 : index
    %7 = memref.load %arg1[%c7] : memref<128xf32, #tpu.memory_space<smem>>
    %c8 = arith.constant 8 : index
    %8 = memref.load %arg1[%c8] : memref<128xf32, #tpu.memory_space<smem>>
    %c9 = arith.constant 9 : index
    %9 = memref.load %arg1[%c9] : memref<128xf32, #tpu.memory_space<smem>>
    %c10 = arith.constant 10 : index
    %10 = memref.load %arg1[%c10] : memref<128xf32, #tpu.memory_space<smem>>
    %c11 = arith.constant 11 : index
    %11 = memref.load %arg1[%c11] : memref<128xf32, #tpu.memory_space<smem>>
    %c12 = arith.constant 12 : index
    %12 = memref.load %arg1[%c12] : memref<128xf32, #tpu.memory_space<smem>>
    %c13 = arith.constant 13 : index
    %13 = memref.load %arg1[%c13] : memref<128xf32, #tpu.memory_space<smem>>
    %c14 = arith.constant 14 : index
    %14 = memref.load %arg1[%c14] : memref<128xf32, #tpu.memory_space<smem>>
    %c15 = arith.constant 15 : index
    %15 = memref.load %arg1[%c15] : memref<128xf32, #tpu.memory_space<smem>>
    %c16 = arith.constant 16 : index
    %16 = memref.load %arg1[%c16] : memref<128xf32, #tpu.memory_space<smem>>
    %c17 = arith.constant 17 : index
    %17 = memref.load %arg1[%c17] : memref<128xf32, #tpu.memory_space<smem>>
    %c18 = arith.constant 18 : index
    %18 = memref.load %arg1[%c18] : memref<128xf32, #tpu.memory_space<smem>>
    %c19 = arith.constant 19 : index
    %19 = memref.load %arg1[%c19] : memref<128xf32, #tpu.memory_space<smem>>
    %c20 = arith.constant 20 : index
    %20 = memref.load %arg1[%c20] : memref<128xf32, #tpu.memory_space<smem>>
    %c21 = arith.constant 21 : index
    %21 = memref.load %arg1[%c21] : memref<128xf32, #tpu.memory_space<smem>>
    %c22 = arith.constant 22 : index
    %22 = memref.load %arg1[%c22] : memref<128xf32, #tpu.memory_space<smem>>
    %c23 = arith.constant 23 : index
    %23 = memref.load %arg1[%c23] : memref<128xf32, #tpu.memory_space<smem>>
    %c24 = arith.constant 24 : index
    %24 = memref.load %arg1[%c24] : memref<128xf32, #tpu.memory_space<smem>>
    %c25 = arith.constant 25 : index
    %25 = memref.load %arg1[%c25] : memref<128xf32, #tpu.memory_space<smem>>
    %c26 = arith.constant 26 : index
    %26 = memref.load %arg1[%c26] : memref<128xf32, #tpu.memory_space<smem>>
    %c27 = arith.constant 27 : index
    %27 = memref.load %arg1[%c27] : memref<128xf32, #tpu.memory_space<smem>>
    %c28 = arith.constant 28 : index
    %28 = memref.load %arg1[%c28] : memref<128xf32, #tpu.memory_space<smem>>
    %c29 = arith.constant 29 : index
    %29 = memref.load %arg1[%c29] : memref<128xf32, #tpu.memory_space<smem>>
    %c30 = arith.constant 30 : index
    %30 = memref.load %arg1[%c30] : memref<128xf32, #tpu.memory_space<smem>>
    %c31 = arith.constant 31 : index
    %31 = memref.load %arg1[%c31] : memref<128xf32, #tpu.memory_space<smem>>
    %c32 = arith.constant 32 : index
    %32 = memref.load %arg1[%c32] : memref<128xf32, #tpu.memory_space<smem>>
    %c33 = arith.constant 33 : index
    %33 = memref.load %arg1[%c33] : memref<128xf32, #tpu.memory_space<smem>>
    %c34 = arith.constant 34 : index
    %34 = memref.load %arg1[%c34] : memref<128xf32, #tpu.memory_space<smem>>
    %c35 = arith.constant 35 : index
    %35 = memref.load %arg1[%c35] : memref<128xf32, #tpu.memory_space<smem>>
    %c36 = arith.constant 36 : index
    %36 = memref.load %arg1[%c36] : memref<128xf32, #tpu.memory_space<smem>>
    %c37 = arith.constant 37 : index
    %37 = memref.load %arg1[%c37] : memref<128xf32, #tpu.memory_space<smem>>
    %c38 = arith.constant 38 : index
    %38 = memref.load %arg1[%c38] : memref<128xf32, #tpu.memory_space<smem>>
    %c39 = arith.constant 39 : index
    %39 = memref.load %arg1[%c39] : memref<128xf32, #tpu.memory_space<smem>>
    %c40 = arith.constant 40 : index
    %40 = memref.load %arg1[%c40] : memref<128xf32, #tpu.memory_space<smem>>
    %c41 = arith.constant 41 : index
    %41 = memref.load %arg1[%c41] : memref<128xf32, #tpu.memory_space<smem>>
    %c42 = arith.constant 42 : index
    %42 = memref.load %arg1[%c42] : memref<128xf32, #tpu.memory_space<smem>>
    %c43 = arith.constant 43 : index
    %43 = memref.load %arg1[%c43] : memref<128xf32, #tpu.memory_space<smem>>
    %c44 = arith.constant 44 : index
    %44 = memref.load %arg1[%c44] : memref<128xf32, #tpu.memory_space<smem>>
    %c45 = arith.constant 45 : index
    %45 = memref.load %arg1[%c45] : memref<128xf32, #tpu.memory_space<smem>>
    %c46 = arith.constant 46 : index
    %46 = memref.load %arg1[%c46] : memref<128xf32, #tpu.memory_space<smem>>
    %c47 = arith.constant 47 : index
    %47 = memref.load %arg1[%c47] : memref<128xf32, #tpu.memory_space<smem>>
    %c48 = arith.constant 48 : index
    %48 = memref.load %arg1[%c48] : memref<128xf32, #tpu.memory_space<smem>>
    %c49 = arith.constant 49 : index
    %49 = memref.load %arg1[%c49] : memref<128xf32, #tpu.memory_space<smem>>
    %c50 = arith.constant 50 : index
    %50 = memref.load %arg1[%c50] : memref<128xf32, #tpu.memory_space<smem>>
    %c51 = arith.constant 51 : index
    %51 = memref.load %arg1[%c51] : memref<128xf32, #tpu.memory_space<smem>>
    %c52 = arith.constant 52 : index
    %52 = memref.load %arg1[%c52] : memref<128xf32, #tpu.memory_space<smem>>
    %c53 = arith.constant 53 : index
    %53 = memref.load %arg1[%c53] : memref<128xf32, #tpu.memory_space<smem>>
    %c54 = arith.constant 54 : index
    %54 = memref.load %arg1[%c54] : memref<128xf32, #tpu.memory_space<smem>>
    %c55 = arith.constant 55 : index
    %55 = memref.load %arg1[%c55] : memref<128xf32, #tpu.memory_space<smem>>
    %c56 = arith.constant 56 : index
    %56 = memref.load %arg1[%c56] : memref<128xf32, #tpu.memory_space<smem>>
    %c57 = arith.constant 57 : index
    %57 = memref.load %arg1[%c57] : memref<128xf32, #tpu.memory_space<smem>>
    %c58 = arith.constant 58 : index
    %58 = memref.load %arg1[%c58] : memref<128xf32, #tpu.memory_space<smem>>
    %c59 = arith.constant 59 : index
    %59 = memref.load %arg1[%c59] : memref<128xf32, #tpu.memory_space<smem>>
    %c60 = arith.constant 60 : index
    %60 = memref.load %arg1[%c60] : memref<128xf32, #tpu.memory_space<smem>>
    %c61 = arith.constant 61 : index
    %61 = memref.load %arg1[%c61] : memref<128xf32, #tpu.memory_space<smem>>
    %c62 = arith.constant 62 : index
    %62 = memref.load %arg1[%c62] : memref<128xf32, #tpu.memory_space<smem>>
    %c63 = arith.constant 63 : index
    %63 = memref.load %arg1[%c63] : memref<128xf32, #tpu.memory_space<smem>>
    %c64 = arith.constant 64 : index
    %64 = memref.load %arg1[%c64] : memref<128xf32, #tpu.memory_space<smem>>
    %c65 = arith.constant 65 : index
    %65 = memref.load %arg1[%c65] : memref<128xf32, #tpu.memory_space<smem>>
    %c66 = arith.constant 66 : index
    %66 = memref.load %arg1[%c66] : memref<128xf32, #tpu.memory_space<smem>>
    %c67 = arith.constant 67 : index
    %67 = memref.load %arg1[%c67] : memref<128xf32, #tpu.memory_space<smem>>
    %c68 = arith.constant 68 : index
    %68 = memref.load %arg1[%c68] : memref<128xf32, #tpu.memory_space<smem>>
    %c69 = arith.constant 69 : index
    %69 = memref.load %arg1[%c69] : memref<128xf32, #tpu.memory_space<smem>>
    %c70 = arith.constant 70 : index
    %70 = memref.load %arg1[%c70] : memref<128xf32, #tpu.memory_space<smem>>
    %c71 = arith.constant 71 : index
    %71 = memref.load %arg1[%c71] : memref<128xf32, #tpu.memory_space<smem>>
    %c72 = arith.constant 72 : index
    %72 = memref.load %arg1[%c72] : memref<128xf32, #tpu.memory_space<smem>>
    %c73 = arith.constant 73 : index
    %73 = memref.load %arg1[%c73] : memref<128xf32, #tpu.memory_space<smem>>
    %c74 = arith.constant 74 : index
    %74 = memref.load %arg1[%c74] : memref<128xf32, #tpu.memory_space<smem>>
    %c75 = arith.constant 75 : index
    %75 = memref.load %arg1[%c75] : memref<128xf32, #tpu.memory_space<smem>>
    %c76 = arith.constant 76 : index
    %76 = memref.load %arg1[%c76] : memref<128xf32, #tpu.memory_space<smem>>
    %c77 = arith.constant 77 : index
    %77 = memref.load %arg1[%c77] : memref<128xf32, #tpu.memory_space<smem>>
    %c78 = arith.constant 78 : index
    %78 = memref.load %arg1[%c78] : memref<128xf32, #tpu.memory_space<smem>>
    %c79 = arith.constant 79 : index
    %79 = memref.load %arg1[%c79] : memref<128xf32, #tpu.memory_space<smem>>
    %c80 = arith.constant 80 : index
    %80 = memref.load %arg1[%c80] : memref<128xf32, #tpu.memory_space<smem>>
    %c81 = arith.constant 81 : index
    %81 = memref.load %arg1[%c81] : memref<128xf32, #tpu.memory_space<smem>>
    %c82 = arith.constant 82 : index
    %82 = memref.load %arg1[%c82] : memref<128xf32, #tpu.memory_space<smem>>
    %c83 = arith.constant 83 : index
    %83 = memref.load %arg1[%c83] : memref<128xf32, #tpu.memory_space<smem>>
    %c84 = arith.constant 84 : index
    %84 = memref.load %arg1[%c84] : memref<128xf32, #tpu.memory_space<smem>>
    %c85 = arith.constant 85 : index
    %85 = memref.load %arg1[%c85] : memref<128xf32, #tpu.memory_space<smem>>
    %c0_i32 = arith.constant 0 : i32
    %c1_i32 = arith.constant 1 : i32
    %86 = arith.muli %c0_i32, %c1_i32 : i32
    %c0_i32_0 = arith.constant 0 : i32
    %87 = arith.addi %c0_i32_0, %86 : i32
    %c8_i32 = arith.constant 8 : i32
    %88 = arith.muli %87, %c8_i32 : i32
    %89 = tpu.assume_multiple %88, 8 : i32
    %c0_1 = arith.constant 0 : index
    %90 = arith.index_cast %89 : i32 to index
    %c0_2 = arith.constant 0 : index
    %91 = vector.load %arg2[%c0_1, %90, %c0_2] : memref<4x8x128xf32, #tpu.memory_space<vmem>>, vector<1x8x128xf32>
    %92 = vector.shape_cast %91 : vector<1x8x128xf32> to vector<8x128xf32>
    %c1_3 = arith.constant 1 : index
    %93 = arith.index_cast %89 : i32 to index
    %c0_4 = arith.constant 0 : index
    %94 = vector.load %arg2[%c1_3, %93, %c0_4] : memref<4x8x128xf32, #tpu.memory_space<vmem>>, vector<1x8x128xf32>
    %95 = vector.shape_cast %94 : vector<1x8x128xf32> to vector<8x128xf32>
    %c2_5 = arith.constant 2 : index
    %96 = arith.index_cast %89 : i32 to index
    %c0_6 = arith.constant 0 : index
    %97 = vector.load %arg2[%c2_5, %96, %c0_6] : memref<4x8x128xf32, #tpu.memory_space<vmem>>, vector<1x8x128xf32>
    %98 = vector.shape_cast %97 : vector<1x8x128xf32> to vector<8x128xf32>
    %c3_7 = arith.constant 3 : index
    %99 = arith.index_cast %89 : i32 to index
    %c0_8 = arith.constant 0 : index
    %100 = vector.load %arg2[%c3_7, %99, %c0_8] : memref<4x8x128xf32, #tpu.memory_space<vmem>>, vector<1x8x128xf32>
    %101 = vector.shape_cast %100 : vector<1x8x128xf32> to vector<8x128xf32>
    %102 = vector.broadcast %0 : f32 to vector<8x128xf32>
    %103 = arith.mulf %92, %102 : vector<8x128xf32>
    %104 = vector.broadcast %8 : f32 to vector<8x128xf32>
    %105 = arith.mulf %95, %104 : vector<8x128xf32>
    %106 = arith.addf %103, %105 : vector<8x128xf32>
    %107 = vector.broadcast %16 : f32 to vector<8x128xf32>
    %108 = arith.mulf %98, %107 : vector<8x128xf32>
    %109 = arith.addf %106, %108 : vector<8x128xf32>
    %110 = vector.broadcast %24 : f32 to vector<8x128xf32>
    %111 = arith.mulf %101, %110 : vector<8x128xf32>
    %112 = arith.addf %109, %111 : vector<8x128xf32>
    %113 = vector.broadcast %32 : f32 to vector<8x128xf32>
    %114 = arith.addf %112, %113 : vector<8x128xf32>
    %cst = arith.constant 0.000000e+00 : f32
    %115 = vector.broadcast %cst : f32 to vector<8x128xf32>
    %116 = arith.maximumf %114, %115 : vector<8x128xf32>
    %117 = vector.broadcast %1 : f32 to vector<8x128xf32>
    %118 = arith.mulf %92, %117 : vector<8x128xf32>
    %119 = vector.broadcast %9 : f32 to vector<8x128xf32>
    %120 = arith.mulf %95, %119 : vector<8x128xf32>
    %121 = arith.addf %118, %120 : vector<8x128xf32>
    %122 = vector.broadcast %17 : f32 to vector<8x128xf32>
    %123 = arith.mulf %98, %122 : vector<8x128xf32>
    %124 = arith.addf %121, %123 : vector<8x128xf32>
    %125 = vector.broadcast %25 : f32 to vector<8x128xf32>
    %126 = arith.mulf %101, %125 : vector<8x128xf32>
    %127 = arith.addf %124, %126 : vector<8x128xf32>
    %128 = vector.broadcast %33 : f32 to vector<8x128xf32>
    %129 = arith.addf %127, %128 : vector<8x128xf32>
    %cst_9 = arith.constant 0.000000e+00 : f32
    %130 = vector.broadcast %cst_9 : f32 to vector<8x128xf32>
    %131 = arith.maximumf %129, %130 : vector<8x128xf32>
    %132 = vector.broadcast %2 : f32 to vector<8x128xf32>
    %133 = arith.mulf %92, %132 : vector<8x128xf32>
    %134 = vector.broadcast %10 : f32 to vector<8x128xf32>
    %135 = arith.mulf %95, %134 : vector<8x128xf32>
    %136 = arith.addf %133, %135 : vector<8x128xf32>
    %137 = vector.broadcast %18 : f32 to vector<8x128xf32>
    %138 = arith.mulf %98, %137 : vector<8x128xf32>
    %139 = arith.addf %136, %138 : vector<8x128xf32>
    %140 = vector.broadcast %26 : f32 to vector<8x128xf32>
    %141 = arith.mulf %101, %140 : vector<8x128xf32>
    %142 = arith.addf %139, %141 : vector<8x128xf32>
    %143 = vector.broadcast %34 : f32 to vector<8x128xf32>
    %144 = arith.addf %142, %143 : vector<8x128xf32>
    %cst_10 = arith.constant 0.000000e+00 : f32
    %145 = vector.broadcast %cst_10 : f32 to vector<8x128xf32>
    %146 = arith.maximumf %144, %145 : vector<8x128xf32>
    %147 = vector.broadcast %3 : f32 to vector<8x128xf32>
    %148 = arith.mulf %92, %147 : vector<8x128xf32>
    %149 = vector.broadcast %11 : f32 to vector<8x128xf32>
    %150 = arith.mulf %95, %149 : vector<8x128xf32>
    %151 = arith.addf %148, %150 : vector<8x128xf32>
    %152 = vector.broadcast %19 : f32 to vector<8x128xf32>
    %153 = arith.mulf %98, %152 : vector<8x128xf32>
    %154 = arith.addf %151, %153 : vector<8x128xf32>
    %155 = vector.broadcast %27 : f32 to vector<8x128xf32>
    %156 = arith.mulf %101, %155 : vector<8x128xf32>
    %157 = arith.addf %154, %156 : vector<8x128xf32>
    %158 = vector.broadcast %35 : f32 to vector<8x128xf32>
    %159 = arith.addf %157, %158 : vector<8x128xf32>
    %cst_11 = arith.constant 0.000000e+00 : f32
    %160 = vector.broadcast %cst_11 : f32 to vector<8x128xf32>
    %161 = arith.maximumf %159, %160 : vector<8x128xf32>
    %162 = vector.broadcast %4 : f32 to vector<8x128xf32>
    %163 = arith.mulf %92, %162 : vector<8x128xf32>
    %164 = vector.broadcast %12 : f32 to vector<8x128xf32>
    %165 = arith.mulf %95, %164 : vector<8x128xf32>
    %166 = arith.addf %163, %165 : vector<8x128xf32>
    %167 = vector.broadcast %20 : f32 to vector<8x128xf32>
    %168 = arith.mulf %98, %167 : vector<8x128xf32>
    %169 = arith.addf %166, %168 : vector<8x128xf32>
    %170 = vector.broadcast %28 : f32 to vector<8x128xf32>
    %171 = arith.mulf %101, %170 : vector<8x128xf32>
    %172 = arith.addf %169, %171 : vector<8x128xf32>
    %173 = vector.broadcast %36 : f32 to vector<8x128xf32>
    %174 = arith.addf %172, %173 : vector<8x128xf32>
    %cst_12 = arith.constant 0.000000e+00 : f32
    %175 = vector.broadcast %cst_12 : f32 to vector<8x128xf32>
    %176 = arith.maximumf %174, %175 : vector<8x128xf32>
    %177 = vector.broadcast %5 : f32 to vector<8x128xf32>
    %178 = arith.mulf %92, %177 : vector<8x128xf32>
    %179 = vector.broadcast %13 : f32 to vector<8x128xf32>
    %180 = arith.mulf %95, %179 : vector<8x128xf32>
    %181 = arith.addf %178, %180 : vector<8x128xf32>
    %182 = vector.broadcast %21 : f32 to vector<8x128xf32>
    %183 = arith.mulf %98, %182 : vector<8x128xf32>
    %184 = arith.addf %181, %183 : vector<8x128xf32>
    %185 = vector.broadcast %29 : f32 to vector<8x128xf32>
    %186 = arith.mulf %101, %185 : vector<8x128xf32>
    %187 = arith.addf %184, %186 : vector<8x128xf32>
    %188 = vector.broadcast %37 : f32 to vector<8x128xf32>
    %189 = arith.addf %187, %188 : vector<8x128xf32>
    %cst_13 = arith.constant 0.000000e+00 : f32
    %190 = vector.broadcast %cst_13 : f32 to vector<8x128xf32>
    %191 = arith.maximumf %189, %190 : vector<8x128xf32>
    %192 = vector.broadcast %6 : f32 to vector<8x128xf32>
    %193 = arith.mulf %92, %192 : vector<8x128xf32>
    %194 = vector.broadcast %14 : f32 to vector<8x128xf32>
    %195 = arith.mulf %95, %194 : vector<8x128xf32>
    %196 = arith.addf %193, %195 : vector<8x128xf32>
    %197 = vector.broadcast %22 : f32 to vector<8x128xf32>
    %198 = arith.mulf %98, %197 : vector<8x128xf32>
    %199 = arith.addf %196, %198 : vector<8x128xf32>
    %200 = vector.broadcast %30 : f32 to vector<8x128xf32>
    %201 = arith.mulf %101, %200 : vector<8x128xf32>
    %202 = arith.addf %199, %201 : vector<8x128xf32>
    %203 = vector.broadcast %38 : f32 to vector<8x128xf32>
    %204 = arith.addf %202, %203 : vector<8x128xf32>
    %cst_14 = arith.constant 0.000000e+00 : f32
    %205 = vector.broadcast %cst_14 : f32 to vector<8x128xf32>
    %206 = arith.maximumf %204, %205 : vector<8x128xf32>
    %207 = vector.broadcast %7 : f32 to vector<8x128xf32>
    %208 = arith.mulf %92, %207 : vector<8x128xf32>
    %209 = vector.broadcast %15 : f32 to vector<8x128xf32>
    %210 = arith.mulf %95, %209 : vector<8x128xf32>
    %211 = arith.addf %208, %210 : vector<8x128xf32>
    %212 = vector.broadcast %23 : f32 to vector<8x128xf32>
    %213 = arith.mulf %98, %212 : vector<8x128xf32>
    %214 = arith.addf %211, %213 : vector<8x128xf32>
    %215 = vector.broadcast %31 : f32 to vector<8x128xf32>
    %216 = arith.mulf %101, %215 : vector<8x128xf32>
    %217 = arith.addf %214, %216 : vector<8x128xf32>
    %218 = vector.broadcast %39 : f32 to vector<8x128xf32>
    %219 = arith.addf %217, %218 : vector<8x128xf32>
    %cst_15 = arith.constant 0.000000e+00 : f32
    %220 = vector.broadcast %cst_15 : f32 to vector<8x128xf32>
    %221 = arith.maximumf %219, %220 : vector<8x128xf32>
    %222 = vector.broadcast %40 : f32 to vector<8x128xf32>
    %223 = arith.mulf %116, %222 : vector<8x128xf32>
    %224 = vector.broadcast %44 : f32 to vector<8x128xf32>
    %225 = arith.mulf %131, %224 : vector<8x128xf32>
    %226 = arith.addf %223, %225 : vector<8x128xf32>
    %227 = vector.broadcast %48 : f32 to vector<8x128xf32>
    %228 = arith.mulf %146, %227 : vector<8x128xf32>
    %229 = arith.addf %226, %228 : vector<8x128xf32>
    %230 = vector.broadcast %52 : f32 to vector<8x128xf32>
    %231 = arith.mulf %161, %230 : vector<8x128xf32>
    %232 = arith.addf %229, %231 : vector<8x128xf32>
    %233 = vector.broadcast %56 : f32 to vector<8x128xf32>
    %234 = arith.mulf %176, %233 : vector<8x128xf32>
    %235 = arith.addf %232, %234 : vector<8x128xf32>
    %236 = vector.broadcast %60 : f32 to vector<8x128xf32>
    %237 = arith.mulf %191, %236 : vector<8x128xf32>
    %238 = arith.addf %235, %237 : vector<8x128xf32>
    %239 = vector.broadcast %64 : f32 to vector<8x128xf32>
    %240 = arith.mulf %206, %239 : vector<8x128xf32>
    %241 = arith.addf %238, %240 : vector<8x128xf32>
    %242 = vector.broadcast %68 : f32 to vector<8x128xf32>
    %243 = arith.mulf %221, %242 : vector<8x128xf32>
    %244 = arith.addf %241, %243 : vector<8x128xf32>
    %245 = vector.broadcast %72 : f32 to vector<8x128xf32>
    %246 = arith.addf %244, %245 : vector<8x128xf32>
    %cst_16 = arith.constant 0.000000e+00 : f32
    %247 = vector.broadcast %cst_16 : f32 to vector<8x128xf32>
    %248 = arith.maximumf %246, %247 : vector<8x128xf32>
    %249 = vector.broadcast %41 : f32 to vector<8x128xf32>
    %250 = arith.mulf %116, %249 : vector<8x128xf32>
    %251 = vector.broadcast %45 : f32 to vector<8x128xf32>
    %252 = arith.mulf %131, %251 : vector<8x128xf32>
    %253 = arith.addf %250, %252 : vector<8x128xf32>
    %254 = vector.broadcast %49 : f32 to vector<8x128xf32>
    %255 = arith.mulf %146, %254 : vector<8x128xf32>
    %256 = arith.addf %253, %255 : vector<8x128xf32>
    %257 = vector.broadcast %53 : f32 to vector<8x128xf32>
    %258 = arith.mulf %161, %257 : vector<8x128xf32>
    %259 = arith.addf %256, %258 : vector<8x128xf32>
    %260 = vector.broadcast %57 : f32 to vector<8x128xf32>
    %261 = arith.mulf %176, %260 : vector<8x128xf32>
    %262 = arith.addf %259, %261 : vector<8x128xf32>
    %263 = vector.broadcast %61 : f32 to vector<8x128xf32>
    %264 = arith.mulf %191, %263 : vector<8x128xf32>
    %265 = arith.addf %262, %264 : vector<8x128xf32>
    %266 = vector.broadcast %65 : f32 to vector<8x128xf32>
    %267 = arith.mulf %206, %266 : vector<8x128xf32>
    %268 = arith.addf %265, %267 : vector<8x128xf32>
    %269 = vector.broadcast %69 : f32 to vector<8x128xf32>
    %270 = arith.mulf %221, %269 : vector<8x128xf32>
    %271 = arith.addf %268, %270 : vector<8x128xf32>
    %272 = vector.broadcast %73 : f32 to vector<8x128xf32>
    %273 = arith.addf %271, %272 : vector<8x128xf32>
    %cst_17 = arith.constant 0.000000e+00 : f32
    %274 = vector.broadcast %cst_17 : f32 to vector<8x128xf32>
    %275 = arith.maximumf %273, %274 : vector<8x128xf32>
    %276 = vector.broadcast %42 : f32 to vector<8x128xf32>
    %277 = arith.mulf %116, %276 : vector<8x128xf32>
    %278 = vector.broadcast %46 : f32 to vector<8x128xf32>
    %279 = arith.mulf %131, %278 : vector<8x128xf32>
    %280 = arith.addf %277, %279 : vector<8x128xf32>
    %281 = vector.broadcast %50 : f32 to vector<8x128xf32>
    %282 = arith.mulf %146, %281 : vector<8x128xf32>
    %283 = arith.addf %280, %282 : vector<8x128xf32>
    %284 = vector.broadcast %54 : f32 to vector<8x128xf32>
    %285 = arith.mulf %161, %284 : vector<8x128xf32>
    %286 = arith.addf %283, %285 : vector<8x128xf32>
    %287 = vector.broadcast %58 : f32 to vector<8x128xf32>
    %288 = arith.mulf %176, %287 : vector<8x128xf32>
    %289 = arith.addf %286, %288 : vector<8x128xf32>
    %290 = vector.broadcast %62 : f32 to vector<8x128xf32>
    %291 = arith.mulf %191, %290 : vector<8x128xf32>
    %292 = arith.addf %289, %291 : vector<8x128xf32>
    %293 = vector.broadcast %66 : f32 to vector<8x128xf32>
    %294 = arith.mulf %206, %293 : vector<8x128xf32>
    %295 = arith.addf %292, %294 : vector<8x128xf32>
    %296 = vector.broadcast %70 : f32 to vector<8x128xf32>
    %297 = arith.mulf %221, %296 : vector<8x128xf32>
    %298 = arith.addf %295, %297 : vector<8x128xf32>
    %299 = vector.broadcast %74 : f32 to vector<8x128xf32>
    %300 = arith.addf %298, %299 : vector<8x128xf32>
    %cst_18 = arith.constant 0.000000e+00 : f32
    %301 = vector.broadcast %cst_18 : f32 to vector<8x128xf32>
    %302 = arith.maximumf %300, %301 : vector<8x128xf32>
    %303 = vector.broadcast %43 : f32 to vector<8x128xf32>
    %304 = arith.mulf %116, %303 : vector<8x128xf32>
    %305 = vector.broadcast %47 : f32 to vector<8x128xf32>
    %306 = arith.mulf %131, %305 : vector<8x128xf32>
    %307 = arith.addf %304, %306 : vector<8x128xf32>
    %308 = vector.broadcast %51 : f32 to vector<8x128xf32>
    %309 = arith.mulf %146, %308 : vector<8x128xf32>
    %310 = arith.addf %307, %309 : vector<8x128xf32>
    %311 = vector.broadcast %55 : f32 to vector<8x128xf32>
    %312 = arith.mulf %161, %311 : vector<8x128xf32>
    %313 = arith.addf %310, %312 : vector<8x128xf32>
    %314 = vector.broadcast %59 : f32 to vector<8x128xf32>
    %315 = arith.mulf %176, %314 : vector<8x128xf32>
    %316 = arith.addf %313, %315 : vector<8x128xf32>
    %317 = vector.broadcast %63 : f32 to vector<8x128xf32>
    %318 = arith.mulf %191, %317 : vector<8x128xf32>
    %319 = arith.addf %316, %318 : vector<8x128xf32>
    %320 = vector.broadcast %67 : f32 to vector<8x128xf32>
    %321 = arith.mulf %206, %320 : vector<8x128xf32>
    %322 = arith.addf %319, %321 : vector<8x128xf32>
    %323 = vector.broadcast %71 : f32 to vector<8x128xf32>
    %324 = arith.mulf %221, %323 : vector<8x128xf32>
    %325 = arith.addf %322, %324 : vector<8x128xf32>
    %326 = vector.broadcast %75 : f32 to vector<8x128xf32>
    %327 = arith.addf %325, %326 : vector<8x128xf32>
    %cst_19 = arith.constant 0.000000e+00 : f32
    %328 = vector.broadcast %cst_19 : f32 to vector<8x128xf32>
    %329 = arith.maximumf %327, %328 : vector<8x128xf32>
    %330 = vector.broadcast %76 : f32 to vector<8x128xf32>
    %331 = arith.mulf %248, %330 : vector<8x128xf32>
    %332 = vector.broadcast %78 : f32 to vector<8x128xf32>
    %333 = arith.mulf %275, %332 : vector<8x128xf32>
    %334 = arith.addf %331, %333 : vector<8x128xf32>
    %335 = vector.broadcast %80 : f32 to vector<8x128xf32>
    %336 = arith.mulf %302, %335 : vector<8x128xf32>
    %337 = arith.addf %334, %336 : vector<8x128xf32>
    %338 = vector.broadcast %82 : f32 to vector<8x128xf32>
    %339 = arith.mulf %329, %338 : vector<8x128xf32>
    %340 = arith.addf %337, %339 : vector<8x128xf32>
    %341 = vector.broadcast %84 : f32 to vector<8x128xf32>
    %342 = arith.addf %340, %341 : vector<8x128xf32>
    %343 = vector.broadcast %77 : f32 to vector<8x128xf32>
    %344 = arith.mulf %248, %343 : vector<8x128xf32>
    %345 = vector.broadcast %79 : f32 to vector<8x128xf32>
    %346 = arith.mulf %275, %345 : vector<8x128xf32>
    %347 = arith.addf %344, %346 : vector<8x128xf32>
    %348 = vector.broadcast %81 : f32 to vector<8x128xf32>
    %349 = arith.mulf %302, %348 : vector<8x128xf32>
    %350 = arith.addf %347, %349 : vector<8x128xf32>
    %351 = vector.broadcast %83 : f32 to vector<8x128xf32>
    %352 = arith.mulf %329, %351 : vector<8x128xf32>
    %353 = arith.addf %350, %352 : vector<8x128xf32>
    %354 = vector.broadcast %85 : f32 to vector<8x128xf32>
    %355 = arith.addf %353, %354 : vector<8x128xf32>
    %356 = arith.subf %342, %355 : vector<8x128xf32>
    %cst_20 = arith.constant 8.000000e+01 : f32
    %357 = vector.broadcast %cst_20 : f32 to vector<8x128xf32>
    %358 = arith.minimumf %356, %357 : vector<8x128xf32>
    %359 = math.exp %358 : vector<8x128xf32>
    %cst_21 = arith.constant 1.000000e+00 : f32
    %360 = vector.broadcast %cst_21 : f32 to vector<8x128xf32>
    %361 = arith.addf %360, %359 : vector<8x128xf32>
    %cst_22 = arith.constant 1.000000e+00 : f32
    %362 = vector.broadcast %cst_22 : f32 to vector<8x128xf32>
    %363 = arith.divf %362, %361 : vector<8x128xf32>
    %cst_23 = arith.constant 0.000000e+00 : f32
    %cst_24 = arith.constant 1.000000e+00 : f32
    %364 = vector.broadcast %cst_23 : f32 to vector<8x128xf32>
    %365 = arith.maximumf %364, %363 : vector<8x128xf32>
    %366 = vector.broadcast %cst_24 : f32 to vector<8x128xf32>
    %367 = arith.minimumf %366, %365 : vector<8x128xf32>
    %cst_25 = arith.constant 1.000000e+00 : f32
    %368 = vector.broadcast %cst_25 : f32 to vector<8x128xf32>
    %369 = arith.subf %368, %367 : vector<8x128xf32>
    %c0_26 = arith.constant 0 : index
    %370 = arith.index_cast %89 : i32 to index
    %c0_27 = arith.constant 0 : index
    %371 = vector.load %arg3[%c0_26, %370, %c0_27] : memref<2x8x128xf32, #tpu.memory_space<vmem>>, vector<1x8x128xf32>
    %372 = vector.shape_cast %371 : vector<1x8x128xf32> to vector<8x128xf32>
    %373 = vector.shape_cast %369 : vector<8x128xf32> to vector<1x8x128xf32>
    tpu.vector_store %arg3[%c0_26, %370, %c0_27], %373 {strides = array<i32>} : memref<2x8x128xf32, #tpu.memory_space<vmem>>, vector<1x8x128xf32>,
    %c1_28 = arith.constant 1 : index
    %374 = arith.index_cast %89 : i32 to index
    %c0_29 = arith.constant 0 : index
    %375 = vector.load %arg3[%c1_28, %374, %c0_29] : memref<2x8x128xf32, #tpu.memory_space<vmem>>, vector<1x8x128xf32>
    %376 = vector.shape_cast %375 : vector<1x8x128xf32> to vector<8x128xf32>
    %377 = vector.shape_cast %367 : vector<8x128xf32> to vector<1x8x128xf32>
    tpu.vector_store %arg3[%c1_28, %374, %c0_29], %377 {strides = array<i32>} : memref<2x8x128xf32, #tpu.memory_space<vmem>>, vector<1x8x128xf32>,
    %c1_i32_30 = arith.constant 1 : i32
    return
  }
  func.func @transform_0(%arg0: i32) -> i32 {
    %c0_i32 = arith.constant 0 : i32
    %c0_i32_0 = arith.constant 0 : i32
    return %c0_i32 : i32
  }
  func.func @transform_1(%arg0: i32) -> (i32, i32, i32) {
    %c0_i32 = arith.constant 0 : i32
    %c0_i32_0 = arith.constant 0 : i32
    %c0_i32_1 = arith.constant 0 : i32
    return %c0_i32, %arg0, %c0_i32_0 : i32, i32, i32
  }
  func.func @transform_2(%arg0: i32) -> (i32, i32, i32) {
    %c0_i32 = arith.constant 0 : i32
    %c0_i32_0 = arith.constant 0 : i32
    %c0_i32_1 = arith.constant 0 : i32
    return %c0_i32, %arg0, %c0_i32_0 : i32, i32, i32
  }
}

</mosaic_0001>

<llo_original>
// kernel: nnactor_forward.1
$region0: #{nnactor_forward.1}
  #allocation0 [shape = 'u32[]', space=smem, size = 0x4, offset = 0x4, fixed_abs, tag = 'smem constant byte address 0x4 - core index']
  #allocation1 [shape = 'u32[72,128]{1,0:T(1,128)}', space=vmem, size = 0x9000, scoped, tag = 'internal scratch']
  %s0 = inlined_call_operand.vmem [shape: f32[128], index: 0, kind: input, shape index: {}]
  %s1 = inlined_call_operand.vmem [shape: f32[4,8,128], index: 1, kind: input, shape index: {}]
  %s2 = inlined_call_operand.vmem [shape: f32[2,8,128], index: 2, kind: output, shape index: {}]
  %s3 = sld [smem:[#allocation0]]
  $region22: #{nnactor_forward.1} parent=0
    _
  %s5 = ssub.s32 1, %s3
  %s6 = scalar_select 0, %s5, %s3
  $region1: #{nnactor_forward.1} parent=0
    #allocation2 [shape = 'u8[512]{0}', space=smem, size = 0x200, scoped, tag = 'input window, operand 0, single buffered']
    #allocation3 [shape = 's32[1]{0}', space=sflag, size = 0x4, scoped, tag = 'scoped memory for nnactor_forward.1']
    %7 = vsyncpa [#allocation3], 0
    // Predicated region
    $region2: #{nnactor_forward.1} parent=1 // pred_check
      _
    $region3: #{nnactor_forward.1} parent=1 // pred_check_branch
      %9 = sbr.rel (0) target = $region5
    $region4: #{nnactor_forward.1} parent=1 // pred_region
      %11 = vsyncadd [#allocation3], 0
      %s13 = sshll.u32 %s0, 4
      %s14 = int_to_ptr.vmem [resolvable:$true] %s13
      %16 = dma.vmem_to_smem %s14, 16, [#allocation2], [#allocation3]
    $region5: #{nnactor_forward.1} parent=1 // pred_fallthru
      _
    // Predicated region
    $region6: #{nnactor_forward.1} parent=1 // pred_check
      _
    $region7: #{nnactor_forward.1} parent=1 // pred_check_branch
      %18 = sbr.rel (0) target = $region9
    $region8: #{nnactor_forward.1} parent=1 // pred_region
      _
    $region9: #{nnactor_forward.1} parent=1 // pred_fallthru
      _
    // Predicated region
    $region10: #{nnactor_forward.1} parent=1 // pred_check
      _
    $region11: #{nnactor_forward.1} parent=1 // pred_check_branch
      %20 = sbr.rel (0) target = $region13
    $region12: #{nnactor_forward.1} parent=1 // pred_region
      %22 = dma.done [#allocation3], 16
    $region13: #{nnactor_forward.1} parent=1 // pred_fallthru
      _
    %23 = sfence
    %s24 = sld [smem:[#allocation2]]
    %s25 = sld [smem:[#allocation2 + $0x1]]
    %s26 = sld [smem:[#allocation2 + $0x2]]
    %s27 = sld [smem:[#allocation2 + $0x3]]
    %s28 = sld [smem:[#allocation2 + $0x4]]
    %s29 = sld [smem:[#allocation2 + $0x5]]
    %s30 = sld [smem:[#allocation2 + $0x6]]
    %s31 = sld [smem:[#allocation2 + $0x7]]
    %s32 = sld [smem:[#allocation2 + $0x8]]
    %s33 = sld [smem:[#allocation2 + $0x9]]
    %s34 = sld [smem:[#allocation2 + $0xa]]
    %s35 = sld [smem:[#allocation2 + $0xb]]
    %s36 = sld [smem:[#allocation2 + $0xc]]
    %s37 = sld [smem:[#allocation2 + $0xd]]
    %s38 = sld [smem:[#allocation2 + $0xe]]
    %s39 = sld [smem:[#allocation2 + $0xf]]
    %s40 = sld [smem:[#allocation2 + $0x10]]
    %s41 = sld [smem:[#allocation2 + $0x11]]
    %s42 = sld [smem:[#allocation2 + $0x12]]
    %s43 = sld [smem:[#allocation2 + $0x13]]
    %s44 = sld [smem:[#allocation2 + $0x14]]
    %s45 = sld [smem:[#allocation2 + $0x15]]
    %s46 = sld [smem:[#allocation2 + $0x16]]
    %s47 = sld [smem:[#allocation2 + $0x17]]
    %s48 = sld [smem:[#allocation2 + $0x18]]
    %s49 = sld [smem:[#allocation2 + $0x19]]
    %s50 = sld [smem:[#allocation2 + $0x1a]]
    %s51 = sld [smem:[#allocation2 + $0x1b]]
    %s52 = sld [smem:[#allocation2 + $0x1c]]
    %s53 = sld [smem:[#allocation2 + $0x1d]]
    %s54 = sld [smem:[#allocation2 + $0x1e]]
    %s55 = sld [smem:[#allocation2 + $0x1f]]
    %s56 = sld [smem:[#allocation2 + $0x20]]
    %s57 = sld [smem:[#allocation2 + $0x21]]
    %s58 = sld [smem:[#allocation2 + $0x22]]
    %s59 = sld [smem:[#allocation2 + $0x23]]
    %s60 = sld [smem:[#allocation2 + $0x24]]
    %s61 = sld [smem:[#allocation2 + $0x25]]
    %s62 = sld [smem:[#allocation2 + $0x26]]
    %s63 = sld [smem:[#allocation2 + $0x27]]
    %s64 = sld [smem:[#allocation2 + $0x28]]
    %s65 = sld [smem:[#allocation2 + $0x29]]
    %s66 = sld [smem:[#allocation2 + $0x2a]]
    %s67 = sld [smem:[#allocation2 + $0x2b]]
    %s68 = sld [smem:[#allocation2 + $0x2c]]
    %s69 = sld [smem:[#allocation2 + $0x2d]]
    %s70 = sld [smem:[#allocation2 + $0x2e]]
    %s71 = sld [smem:[#allocation2 + $0x2f]]
    %s72 = sld [smem:[#allocation2 + $0x30]]
    %s73 = sld [smem:[#allocation2 + $0x31]]
    %s74 = sld [smem:[#allocation2 + $0x32]]
    %s75 = sld [smem:[#allocation2 + $0x33]]
    %s76 = sld [smem:[#allocation2 + $0x34]]
    %s77 = sld [smem:[#allocation2 + $0x35]]
    %s78 = sld [smem:[#allocation2 + $0x36]]
    %s79 = sld [smem:[#allocation2 + $0x37]]
    %s80 = sld [smem:[#allocation2 + $0x38]]
    %s81 = sld [smem:[#allocation2 + $0x39]]
    %s82 = sld [smem:[#allocation2 + $0x3a]]
    %s83 = sld [smem:[#allocation2 + $0x3b]]
    %s84 = sld [smem:[#allocation2 + $0x3c]]
    %s85 = sld [smem:[#allocation2 + $0x3d]]
    %s86 = sld [smem:[#allocation2 + $0x3e]]
    %s87 = sld [smem:[#allocation2 + $0x3f]]
    %s88 = sld [smem:[#allocation2 + $0x40]]
    %s89 = sld [smem:[#allocation2 + $0x41]]
    %s90 = sld [smem:[#allocation2 + $0x42]]
    %s91 = sld [smem:[#allocation2 + $0x43]]
    %s92 = sld [smem:[#allocation2 + $0x44]]
    %s93 = sld [smem:[#allocation2 + $0x45]]
    %s94 = sld [smem:[#allocation2 + $0x46]]
    %s95 = sld [smem:[#allocation2 + $0x47]]
    %s96 = sld [smem:[#allocation2 + $0x48]]
    %s97 = sld [smem:[#allocation2 + $0x49]]
    %s98 = sld [smem:[#allocation2 + $0x4a]]
    %s99 = sld [smem:[#allocation2 + $0x4b]]
    %s100 = sld [smem:[#allocation2 + $0x4c]]
    %s101 = sld [smem:[#allocation2 + $0x4d]]
    %s102 = sld [smem:[#allocation2 + $0x4e]]
    %s103 = sld [smem:[#allocation2 + $0x4f]]
    %s104 = sld [smem:[#allocation2 + $0x50]]
    %s105 = sld [smem:[#allocation2 + $0x51]]
    %s106 = sld [smem:[#allocation2 + $0x52]]
    %s107 = sld [smem:[#allocation2 + $0x53]]
    %s108 = sld [smem:[#allocation2 + $0x54]]
    %s109 = sld [smem:[#allocation2 + $0x55]]
    %v110 = vld [vmem:[%s1] sm:$0xff]
    %s111 = sadd.s32 0, 8
    %s112 = scalar_lea.vmem %s1, %s111
    %v113 = vld [vmem:[%s112] sm:$0xff]
    %s114 = sadd.s32 0, 16
    %s115 = scalar_lea.vmem %s1, %s114
    %v116 = vld [vmem:[%s115] sm:$0xff]
    %s117 = sadd.s32 0, 24
    %s118 = scalar_lea.vmem %s1, %s117
    %v119 = vld [vmem:[%s118] sm:$0xff]
    %v120 = vstv %s24
    %v121 = vmul.f32 %v110, %v120
    %v122 = vstv %s32
    %v123 = vmul.f32 %v113, %v122
    %v124 = vadd.f32 %v121, %v123
    %v125 = vstv %s40
    %v126 = vmul.f32 %v116, %v125
    %v127 = vadd.f32 %v124, %v126
    %v128 = vstv %s48
    %v129 = vmul.f32 %v119, %v128
    %v130 = vadd.f32 %v127, %v129
    %v131 = vstv %s56
    %v132 = vadd.f32 %v130, %v131
    %v133 = vmax.f32 %v132, 0.0
    %v134 = vstv %s25
    %v135 = vmul.f32 %v110, %v134
    %v136 = vstv %s33
    %v137 = vmul.f32 %v113, %v136
    %v138 = vadd.f32 %v135, %v137
    %v139 = vstv %s41
    %v140 = vmul.f32 %v116, %v139
    %v141 = vadd.f32 %v138, %v140
    %v142 = vstv %s49
    %v143 = vmul.f32 %v119, %v142
    %v144 = vadd.f32 %v141, %v143
    %v145 = vstv %s57
    %v146 = vadd.f32 %v144, %v145
    %v147 = vmax.f32 %v146, 0.0
    %v148 = vstv %s26
    %v149 = vmul.f32 %v110, %v148
    %v150 = vstv %s34
    %v151 = vmul.f32 %v113, %v150
    %v152 = vadd.f32 %v149, %v151
    %v153 = vstv %s42
    %v154 = vmul.f32 %v116, %v153
    %v155 = vadd.f32 %v152, %v154
    %v156 = vstv %s50
    %v157 = vmul.f32 %v119, %v156
    %v158 = vadd.f32 %v155, %v157
    %v159 = vstv %s58
    %v160 = vadd.f32 %v158, %v159
    %v161 = vmax.f32 %v160, 0.0
    %v162 = vstv %s27
    %v163 = vmul.f32 %v110, %v162
    %v164 = vstv %s35
    %v165 = vmul.f32 %v113, %v164
    %v166 = vadd.f32 %v163, %v165
    %v167 = vstv %s43
    %v168 = vmul.f32 %v116, %v167
    %v169 = vadd.f32 %v166, %v168
    %v170 = vstv %s51
    %v171 = vmul.f32 %v119, %v170
    %v172 = vadd.f32 %v169, %v171
    %v173 = vstv %s59
    %v174 = vadd.f32 %v172, %v173
    %v175 = vmax.f32 %v174, 0.0
    %v176 = vstv %s28
    %v177 = vmul.f32 %v110, %v176
    %v178 = vstv %s36
    %v179 = vmul.f32 %v113, %v178
    %v180 = vadd.f32 %v177, %v179
    %v181 = vstv %s44
    %v182 = vmul.f32 %v116, %v181
    %v183 = vadd.f32 %v180, %v182
    %v184 = vstv %s52
    %v185 = vmul.f32 %v119, %v184
    %v186 = vadd.f32 %v183, %v185
    %v187 = vstv %s60
    %v188 = vadd.f32 %v186, %v187
    %v189 = vmax.f32 %v188, 0.0
    %v190 = vstv %s29
    %v191 = vmul.f32 %v110, %v190
    %v192 = vstv %s37
    %v193 = vmul.f32 %v113, %v192
    %v194 = vadd.f32 %v191, %v193
    %v195 = vstv %s45
    %v196 = vmul.f32 %v116, %v195
    %v197 = vadd.f32 %v194, %v196
    %v198 = vstv %s53
    %v199 = vmul.f32 %v119, %v198
    %v200 = vadd.f32 %v197, %v199
    %v201 = vstv %s61
    %v202 = vadd.f32 %v200, %v201
    %v203 = vmax.f32 %v202, 0.0
    %v204 = vstv %s30
    %v205 = vmul.f32 %v110, %v204
    %v206 = vstv %s38
    %v207 = vmul.f32 %v113, %v206
    %v208 = vadd.f32 %v205, %v207
    %v209 = vstv %s46
    %v210 = vmul.f32 %v116, %v209
    %v211 = vadd.f32 %v208, %v210
    %v212 = vstv %s54
    %v213 = vmul.f32 %v119, %v212
    %v214 = vadd.f32 %v211, %v213
    %v215 = vstv %s62
    %v216 = vadd.f32 %v214, %v215
    %v217 = vmax.f32 %v216, 0.0
    %v218 = vstv %s31
    %v219 = vmul.f32 %v110, %v218
    %v220 = vstv %s39
    %v221 = vmul.f32 %v113, %v220
    %v222 = vadd.f32 %v219, %v221
    %v223 = vstv %s47
    %v224 = vmul.f32 %v116, %v223
    %v225 = vadd.f32 %v222, %v224
    %v226 = vstv %s55
    %v227 = vmul.f32 %v119, %v226
    %v228 = vadd.f32 %v225, %v227
    %v229 = vstv %s63
    %v230 = vadd.f32 %v228, %v229
    %v231 = vmax.f32 %v230, 0.0
    %v232 = vstv %s64
    %v233 = vmul.f32 %v133, %v232
    %v234 = vstv %s68
    %v235 = vmul.f32 %v147, %v234
    %v236 = vadd.f32 %v233, %v235
    %v237 = vstv %s72
    %v238 = vmul.f32 %v161, %v237
    %v239 = vadd.f32 %v236, %v238
    %v240 = vstv %s76
    %v241 = vmul.f32 %v175, %v240
    %v242 = vadd.f32 %v239, %v241
    %v243 = vstv %s80
    %v244 = vmul.f32 %v189, %v243
    %v245 = vadd.f32 %v242, %v244
    %v246 = vstv %s84
    %v247 = vmul.f32 %v203, %v246
    %v248 = vadd.f32 %v245, %v247
    %v249 = vstv %s88
    %v250 = vmul.f32 %v217, %v249
    %v251 = vadd.f32 %v248, %v250
    %v252 = vstv %s92
    %v253 = vmul.f32 %v231, %v252
    %v254 = vadd.f32 %v251, %v253
    %v255 = vstv %s96
    %v256 = vadd.f32 %v254, %v255
    %v257 = vmax.f32 %v256, 0.0
    %v258 = vstv %s65
    %v259 = vmul.f32 %v133, %v258
    %v260 = vstv %s69
    %v261 = vmul.f32 %v147, %v260
    %v262 = vadd.f32 %v259, %v261
    %v263 = vstv %s73
    %v264 = vmul.f32 %v161, %v263
    %v265 = vadd.f32 %v262, %v264
    %v266 = vstv %s77
    %v267 = vmul.f32 %v175, %v266
    %v268 = vadd.f32 %v265, %v267
    %v269 = vstv %s81
    %v270 = vmul.f32 %v189, %v269
    %v271 = vadd.f32 %v268, %v270
    %v272 = vstv %s85
    %v273 = vmul.f32 %v203, %v272
    %v274 = vadd.f32 %v271, %v273
    %v275 = vstv %s89
    %v276 = vmul.f32 %v217, %v275
    %v277 = vadd.f32 %v274, %v276
    %v278 = vstv %s93
    %v279 = vmul.f32 %v231, %v278
    %v280 = vadd.f32 %v277, %v279
    %v281 = vstv %s97
    %v282 = vadd.f32 %v280, %v281
    %v283 = vmax.f32 %v282, 0.0
    %v284 = vstv %s66
    %v285 = vmul.f32 %v133, %v284
    %v286 = vstv %s70
    %v287 = vmul.f32 %v147, %v286
    %v288 = vadd.f32 %v285, %v287
    %v289 = vstv %s74
    %v290 = vmul.f32 %v161, %v289
    %v291 = vadd.f32 %v288, %v290
    %v292 = vstv %s78
    %v293 = vmul.f32 %v175, %v292
    %v294 = vadd.f32 %v291, %v293
    %v295 = vstv %s82
    %v296 = vmul.f32 %v189, %v295
    %v297 = vadd.f32 %v294, %v296
    %v298 = vstv %s86
    %v299 = vmul.f32 %v203, %v298
    %v300 = vadd.f32 %v297, %v299
    %v301 = vstv %s90
    %v302 = vmul.f32 %v217, %v301
    %v303 = vadd.f32 %v300, %v302
    %v304 = vstv %s94
    %v305 = vmul.f32 %v231, %v304
    %v306 = vadd.f32 %v303, %v305
    %v307 = vstv %s98
    %v308 = vadd.f32 %v306, %v307
    %v309 = vmax.f32 %v308, 0.0
    %v310 = vstv %s67
    %v311 = vmul.f32 %v133, %v310
    %v312 = vstv %s71
    %v313 = vmul.f32 %v147, %v312
    %v314 = vadd.f32 %v311, %v313
    %v315 = vstv %s75
    %v316 = vmul.f32 %v161, %v315
    %v317 = vadd.f32 %v314, %v316
    %v318 = vstv %s79
    %v319 = vmul.f32 %v175, %v318
    %v320 = vadd.f32 %v317, %v319
    %v321 = vstv %s83
    %v322 = vmul.f32 %v189, %v321
    %v323 = vadd.f32 %v320, %v322
    %v324 = vstv %s87
    %v325 = vmul.f32 %v203, %v324
    %v326 = vadd.f32 %v323, %v325
    %v327 = vstv %s91
    %v328 = vmul.f32 %v217, %v327
    %v329 = vadd.f32 %v326, %v328
    %v330 = vstv %s95
    %v331 = vmul.f32 %v231, %v330
    %v332 = vadd.f32 %v329, %v331
    %v333 = vstv %s99
    %v334 = vadd.f32 %v332, %v333
    %v335 = vmax.f32 %v334, 0.0
    %v336 = vstv %s100
    %v337 = vmul.f32 %v257, %v336
    %v338 = vstv %s102
    %v339 = vmul.f32 %v283, %v338
    %v340 = vadd.f32 %v337, %v339
    %v341 = vstv %s104
    %v342 = vmul.f32 %v309, %v341
    %v343 = vadd.f32 %v340, %v342
    %v344 = vstv %s106
    %v345 = vmul.f32 %v335, %v344
    %v346 = vadd.f32 %v343, %v345
    %v347 = vstv %s108
    %v348 = vadd.f32 %v346, %v347
    %v349 = vstv %s101
    %v350 = vmul.f32 %v257, %v349
    %v351 = vstv %s103
    %v352 = vmul.f32 %v283, %v351
    %v353 = vadd.f32 %v350, %v352
    %v354 = vstv %s105
    %v355 = vmul.f32 %v309, %v354
    %v356 = vadd.f32 %v353, %v355
    %v357 = vstv %s107
    %v358 = vmul.f32 %v335, %v357
    %v359 = vadd.f32 %v356, %v358
    %v360 = vstv %s109
    %v361 = vadd.f32 %v359, %v360
    %v362 = vsub.f32 %v348, %v361
    %v363 = vmin.f32 %v362, 80.0
    %v364 = vmul.f32 %v363, 1.442695
    %v365 = vpow.pop %v364
    %v366 = vadd.f32 %v365, 1.0
    %v367 = vrcp.pop %v366
    %v368 = vmul.f32 %v366, %v367
    %v369 = vsub.f32 1.0, %v368
    %v370 = vmul.f32 %v367, %v369
    %v371 = vadd.f32 %v367, %v370
    %vm372 = vweird.f32 %v366
    %vm373 = vweird.f32 %v367
    %vm374 = vmor %vm372, %vm373
    %v375 = vsel %vm374, %v367, %v371
    %v376 = vand.u32 2147483647, %v366
    %vm377 = vcmp.eq.f32.partialorder %v376, 8.507059e+37
    %v378 = vand.u32 %v366, 2147483648
    %v379 = vor.u32 1.1754944e-38, %v378
    %v380 = vsel %vm377, %v379, %v375
    %v381 = vmul.f32 1.0, %v380
    %v382 = vmax.f32 %v381, 0.0
    %v383 = vmin.f32 %v382, 1.0
    %v384 = vsub.f32 1.0, %v383
    %385 = vst [vmem:[%s2] sm:$0xff] %v384
    %s386 = scalar_lea.vmem %s2, %s111
    %387 = vst [vmem:[%s386] sm:$0xff] %v383
    // Predicated region
    $region14: #{nnactor_forward.1} parent=1 // pred_check
      _
    $region15: #{nnactor_forward.1} parent=1 // pred_check_branch
      %389 = sbr.rel (0) target = $region17
    $region16: #{nnactor_forward.1} parent=1 // pred_region
      _
    $region17: #{nnactor_forward.1} parent=1 // pred_fallthru
      _
    // Predicated region
    $region18: #{nnactor_forward.1} parent=1 // pred_check
      _
    $region19: #{nnactor_forward.1} parent=1 // pred_check_branch
      %391 = sbr.rel (0) target = $region21
    $region20: #{nnactor_forward.1} parent=1 // pred_region
      _
    $region21: #{nnactor_forward.1} parent=1 // pred_fallthru
      _
    %392 = vsyncpa [#allocation3], 1

</llo_original>
